<compile_context>
chip_gen: v5e
topology: v5e:2x2
jax: 0.10.0
libtpu: 0.0.40
codegen_flags: <defaults>
</compile_context>

<pallas_src>
import math
from functools import partial

import jax
import jax.numpy as jnp
from jax import lax
from jax.experimental import pallas as pl
from jax.experimental.pallas import tpu as pltpu


# 48 MiB: above any tile footprint used here, below v7x's 64 MiB physical VMEM,
# and above v5e's 16 MiB scoped default (which larger tiles would exceed).
_VMEM_LIMIT_BYTES = 48 * 1024 * 1024


# ----------------------------- helpers --------------------------------------

def _round_up(x, m):
    return (x + m - 1) // m * m


def _pick_tile(dim, target, quantum=128):
    """Largest tile <= target that divides `dim`; prefer 256-multiples (v6e/v7x
    2x256^2 MXU), then `quantum`-multiples. Full extent if dim <= target."""
    if dim <= target:
        return dim
    quanta = (256, quantum) if quantum < 256 else (quantum,)
    for q in quanta:
        t = (target // q) * q
        while t >= q:
            if dim % t == 0:
                return t
            t -= q
    # TODO(synk): ragged (non-128-multiple) dims should be padded rather than
    # made fully resident; CLIP widths (512/768/1024, 4x MLP) never hit this.
    return dim


# ------------- fused (LayerNorm?) -> matmul -> bias (+GELU) (+residual) ------

def _fused_matmul_kernel(*refs, activation, has_ln, has_res, eps):
    it = iter(refs)
    x_ref = next(it)
    w_ref = next(it)
    b_ref = next(it)
    g_ref = beta_ref = res_ref = None
    if has_ln:
        g_ref = next(it)
        beta_ref = next(it)
    if has_res:
        res_ref = next(it)
    o_ref = next(it)
    acc_ref = next(it)

    k = pl.program_id(2)

    @pl.when(k == 0)
    def _():
        acc_ref[...] = jnp.zeros_like(acc_ref)

    if has_ln:
        # fp16-safe LayerNorm fused into the matmul prologue (requires tk == K).
        xf = x_ref[...].astype(jnp.float32)
        mu = jnp.mean(xf, axis=-1, keepdims=True)
        xc = xf - mu
        var = jnp.mean(xc * xc, axis=-1, keepdims=True)
        xn = xc * lax.rsqrt(var + eps) * g_ref[...] + beta_ref[...]
        lhs = xn.astype(w_ref.dtype)          # bf16 weights -> bf16 MXU operands
    else:
        lhs = x_ref[...]                      # already in compute dtype

    acc_ref[...] += jnp.dot(lhs, w_ref[...], preferred_element_type=jnp.float32)

    @pl.when(k == pl.num_programs(2) - 1)
    def _():
        r = acc_ref[...] + b_ref[...]                       # bias kept f32
        if activation == "quick_gelu":
            r = r * jax.nn.sigmoid(1.702 * r)               # sigmoid -> EUP slot
        if has_res:
            r = r + res_ref[...].astype(jnp.float32)        # fused residual add
        o_ref[...] = r.astype(o_ref.dtype)


def matmul_bias_act(x2d, w, b, *, activation=None, ln=None, residual=None,
                    ln_eps=1e-5, tm=512, tn=1024, tk=512):
    """x2d: (M, K); w: (K, N); b: (N,).  Optional:
       ln=(gamma, beta): LayerNorm(x) fused before the matmul (tk forced to K),
       residual: (M, N) added after bias/activation.  Returns (M, N)."""
    M, K = x2d.shape
    K2, N = w.shape
    assert K == K2

    tm = min(tm, _round_up(M, 8))
    Mp = _round_up(M, tm)
    tn = _pick_tile(N, tn)
    if ln is not None:
        tk = K        # LN needs the full feature row; K = d_model fits one block
    else:
        tk = _pick_tile(K, tk)

    if Mp != M:
        x2d = jnp.pad(x2d, ((0, Mp - M), (0, 0)))
        if residual is not None:
            residual = jnp.pad(residual, ((0, Mp - M), (0, 0)))

    inputs = [x2d, w, b.reshape(1, N).astype(jnp.float32)]
    in_specs = [
        pl.BlockSpec((tm, tk), lambda i, j, k: (i, k)),
        pl.BlockSpec((tk, tn), lambda i, j, k: (k, j)),
        pl.BlockSpec((1, tn), lambda i, j, k: (0, j)),
    ]
    if ln is not None:
        gamma, beta = ln
        inputs += [gamma.reshape(1, K).astype(jnp.float32),
                   beta.reshape(1, K).astype(jnp.float32)]
        in_specs += [pl.BlockSpec((1, K), lambda i, j, k: (0, 0)),
                     pl.BlockSpec((1, K), lambda i, j, k: (0, 0))]
    if residual is not None:
        inputs.append(residual)
        in_specs.append(pl.BlockSpec((tm, tn), lambda i, j, k: (i, j)))

    grid = (Mp // tm, N // tn, K // tk)
    out = pl.pallas_call(
        partial(_fused_matmul_kernel, activation=activation,
                has_ln=ln is not None, has_res=residual is not None, eps=ln_eps),
        out_shape=jax.ShapeDtypeStruct((Mp, N), x2d.dtype),
        grid=grid,
        in_specs=in_specs,
        out_specs=pl.BlockSpec((tm, tn), lambda i, j, k: (i, j)),
        scratch_shapes=[pltpu.VMEM((tm, tn), jnp.float32)],
        compiler_params=pltpu.CompilerParams(
            dimension_semantics=("parallel", "parallel", "arbitrary"),
            vmem_limit_bytes=_VMEM_LIMIT_BYTES),
    )(*inputs)
    return out[:M] if Mp != M else out


# --------------------------- attention core ----------------------------------

def _attention_kernel(*refs, heads, scale, has_mask, approx_recip):
    if has_mask:
        qkv_ref, m_ref, o_ref = refs
    else:
        qkv_ref, o_ref = refs
        m_ref = None
    three_e = qkv_ref.shape[-1]
    E = three_e // 3
    hd = E // heads

    # All heads of one batch element per grid step; the output slab is a
    # lane-dense (L, E) block (single dense HBM writeback).
    for h in range(heads):
        lo, hi = h * hd, (h + 1) * hd
        q_h = qkv_ref[0, :, lo:hi]               # (L, hd) native dtype -> MXU
        k_h = qkv_ref[0, :, E + lo:E + hi]
        v_h = qkv_ref[0, :, 2 * E + lo:2 * E + hi]
        # NT-form contraction q @ k^T (Mosaic feeds the transposed rhs to the MXU).
        s = lax.dot_general(q_h, k_h, (((1,), (1,)), ((), ())),
                            preferred_element_type=jnp.float32) * scale
        if has_mask:
            s = s + m_ref[...]
        s = s - jnp.max(s, axis=-1, keepdims=True)
        p = jnp.exp(s)
        denom = jnp.sum(p, axis=-1, keepdims=True)
        o_h = jnp.dot(p.astype(v_h.dtype), v_h, preferred_element_type=jnp.float32)
        o_h = o_h * pl.reciprocal(denom, approx=approx_recip)
        o_ref[0, :, lo:hi] = o_h.astype(o_ref.dtype)


def attention(qkv, attn_mask, heads, scale):
    """qkv: (N, L, 3E) batch-major; attn_mask: additive (L, L) or None.
    Returns (N, L, E)."""
    Nb, L, three_e = qkv.shape
    E = three_e // 3
    has_mask = attn_mask is not None
    # Exact divide on the f32 path, fast EUP reciprocal on bf16/f16.
    approx_recip = qkv.dtype != jnp.float32

    inputs = [qkv]
    in_specs = [pl.BlockSpec((1, L, three_e), lambda b: (b, 0, 0))]
    if has_mask:
        inputs.append(attn_mask.astype(jnp.float32))
        in_specs.append(pl.BlockSpec((L, L), lambda b: (0, 0)))

    # TODO(synk): for very long sequences this should tile KV (flash-attention
    # style); CLIP sequence lengths (<=577) fit one VMEM block per batch element.
    return pl.pallas_call(
        partial(_attention_kernel, heads=heads, scale=scale,
                has_mask=has_mask, approx_recip=approx_recip),
        out_shape=jax.ShapeDtypeStruct((Nb, L, E), qkv.dtype),
        grid=(Nb,),
        in_specs=in_specs,
        out_specs=pl.BlockSpec((1, L, E), lambda b: (b, 0, 0)),
        compiler_params=pltpu.CompilerParams(
            dimension_semantics=("parallel",),
            vmem_limit_bytes=_VMEM_LIMIT_BYTES),
    )(*inputs)


# --------------------- ResidualAttentionBlock / Transformer ------------------

def residual_attention_block(x2d, p, attn_mask, *, seq_len, batch):
    """x2d: (batch*seq_len, E) batch-major residual stream."""
    E = x2d.shape[-1]
    H = p["n_head"]
    hd = E // H

    # attention branch: x + out_proj(MHA(ln_1(x)))
    #   ln_1 fused into the QKV matmul prologue; residual fused into out_proj.
    qkv = matmul_bias_act(x2d, p["w_in"], p["b_in"],
                          ln=(p["ln1_g"], p["ln1_b"]))           # (N*L, 3E)
    o = attention(qkv.reshape(batch, seq_len, 3 * E), attn_mask,
                  H, 1.0 / math.sqrt(hd))                        # (N, L, E)
    x2d = matmul_bias_act(o.reshape(batch * seq_len, E),
                          p["w_out"], p["b_out"], residual=x2d)

    # MLP branch: x + c_proj(QuickGELU(c_fc(ln_2(x))))
    h = matmul_bias_act(x2d, p["w_fc"], p["b_fc"],
                        ln=(p["ln2_g"], p["ln2_b"]), activation="quick_gelu")
    x2d = matmul_bias_act(h, p["w_proj"], p["b_proj"], residual=x2d)
    return x2d


def transformer_forward(x, params, attn_mask=None, feature_layers=None):
    """x: (seq, batch, width) — matches nn.MultiheadAttention's (L, N, E)."""
    L, N, E = x.shape
    # Keep the residual stream batch-major for the whole stack so attention can
    # block-index it directly (no per-layer transposes); transpose in/out once.
    xb = jnp.transpose(x, (1, 0, 2)).reshape(N * L, E)
    out = []
    # TODO(synk): visual_prompt prefix concat/slice glue not implemented.
    for i, p in enumerate(params):
        xb = residual_attention_block(xb, p, attn_mask, seq_len=L, batch=N)
        if feature_layers is not None and (i + 1) in feature_layers:
            out.append(jnp.transpose(xb.reshape(N, L, E), (1, 0, 2)))
    if feature_layers is None:
        return jnp.transpose(xb.reshape(N, L, E), (1, 0, 2))
    return out


# ------------------------------ reference ------------------------------------

def _ref_layernorm(x, g, b, eps=1e-5):
    x32 = x.astype(jnp.float32)
    mu = x32.mean(-1, keepdims=True)
    var = ((x32 - mu) ** 2).mean(-1, keepdims=True)
    return ((x32 - mu) * lax.rsqrt(var + eps) * g + b).astype(x.dtype)


def _ref_block(x, p, attn_mask):
    L, N, E = x.shape
    H = p["n_head"]
    hd = E // H
    y = _ref_layernorm(x, p["ln1_g"], p["ln1_b"])
    qkv = y.reshape(L * N, E) @ p["w_in"] + p["b_in"]
    qkv = qkv.reshape(L, N, 3, H, hd)
    q = jnp.transpose(qkv[:, :, 0], (1, 2, 0, 3)).reshape(N * H, L, hd)
    k = jnp.transpose(qkv[:, :, 1], (1, 2, 0, 3)).reshape(N * H, L, hd)
    v = jnp.transpose(qkv[:, :, 2], (1, 2, 0, 3)).reshape(N * H, L, hd)
    s = jnp.einsum("bld,bmd->blm", q, k) / math.sqrt(hd)
    if attn_mask is not None:
        s = s + attn_mask
    a = jax.nn.softmax(s, axis=-1)
    o = jnp.einsum("blm,bmd->bld", a, v)
    o = o.reshape(N, H, L, hd).transpose(2, 0, 1, 3).reshape(L * N, E)
    o = o @ p["w_out"] + p["b_out"]
    x = x + o.reshape(L, N, E)
    y = _ref_layernorm(x, p["ln2_g"], p["ln2_b"])
    h = y.reshape(L * N, E) @ p["w_fc"] + p["b_fc"]
    h = h * jax.nn.sigmoid(1.702 * h)
    h = h @ p["w_proj"] + p["b_proj"]
    x = x + h.reshape(L, N, E)
    return x


def _ref_transformer(x, params, attn_mask=None):
    for p in params:
        x = _ref_block(x, p, attn_mask)
    return x


# -------------------------------- main ---------------------------------------

if __name__ == "__main__":
    # Keep the f32 XLA reference and the in-kernel f32 dots numerically aligned.
    jax.config.update("jax_default_matmul_precision", "highest")

    width, layers, heads = 32, 2, 4
    seq, batch = 8, 2

    key = jax.random.PRNGKey(0)
    kx, kp = jax.random.split(key)

    def linear_init(k, fan_in, fan_out):
        # nn.Linear default init; weights stored (in, out) = torch W^T
        bound = 1.0 / math.sqrt(fan_in)
        kw, kb = jax.random.split(k)
        w = jax.random.uniform(kw, (fan_in, fan_out), jnp.float32, -bound, bound)
        b = jax.random.uniform(kb, (fan_out,), jnp.float32, -bound, bound)
        return w, b

    params = []
    for lk in jax.random.split(kp, layers):
        ks = jax.random.split(lk, 8)
        w_in, b_in = linear_init(ks[0], width, 3 * width)
        w_out, b_out = linear_init(ks[1], width, width)
        w_fc, b_fc = linear_init(ks[2], width, 4 * width)
        w_pj, b_pj = linear_init(ks[3], 4 * width, width)
        params.append(dict(
            n_head=heads,
            ln1_g=1.0 + 0.1 * jax.random.normal(ks[4], (width,), jnp.float32),
            ln1_b=0.1 * jax.random.normal(ks[5], (width,), jnp.float32),
            ln2_g=1.0 + 0.1 * jax.random.normal(ks[6], (width,), jnp.float32),
            ln2_b=0.1 * jax.random.normal(ks[7], (width,), jnp.float32),
            w_in=w_in, b_in=b_in, w_out=w_out, b_out=b_out,
            w_fc=w_fc, b_fc=b_fc, w_proj=w_pj, b_proj=b_pj,
        ))

    x = jax.random.normal(kx, (seq, batch, width), jnp.float32)
    causal = jnp.triu(jnp.full((seq, seq), -1e9, jnp.float32), k=1)

    # --- f32, no mask ---
    out = jax.block_until_ready(transformer_forward(x, params, attn_mask=None))
    ref = _ref_transformer(x, params, attn_mask=None)
    assert out.shape == (seq, batch, width)
    err = float(jnp.max(jnp.abs(out - ref)))
    assert jnp.allclose(out, ref, atol=3e-3, rtol=3e-3), err

    # --- f32, causal additive mask ---
    out_m = jax.block_until_ready(transformer_forward(x, params, attn_mask=causal))
    ref_m = _ref_transformer(x, params, attn_mask=causal)
    err_m = float(jnp.max(jnp.abs(out_m - ref_m)))
    assert jnp.allclose(out_m, ref_m, atol=3e-3, rtol=3e-3), err_m

    # --- bf16 activations/weights feed the MXU (biases / LN params stay f32) ---
    params_bf16 = []
    for p in params:
        q = dict(p)
        for name in ("w_in", "w_out", "w_fc", "w_proj"):
            q[name] = p[name].astype(jnp.bfloat16)
        params_bf16.append(q)
    out_b = jax.block_until_ready(
        transformer_forward(x.astype(jnp.bfloat16), params_bf16, attn_mask=None))
    assert out_b.dtype == jnp.bfloat16
    out_b32 = out_b.astype(jnp.float32)
    assert bool(jnp.all(jnp.isfinite(out_b32)))
    err_b = float(jnp.max(jnp.abs(out_b32 - ref)))
    assert jnp.allclose(out_b32, ref, atol=3e-1, rtol=1e-1), err_b

    print("KERNEL_OK")
</pallas_src>

<mosaic_0001>
module attributes {stable_mosaic.version = 11 : i64} {
  func.func @_fused_matmul_kernel(%arg0: i32, %arg1: i32, %arg2: i32, %arg3: memref<16x32xf32, #tpu.memory_space<vmem>>, %arg4: memref<32x96xf32, #tpu.memory_space<vmem>>, %arg5: memref<1x96xf32, #tpu.memory_space<vmem>>, %arg6: memref<1x32xf32, #tpu.memory_space<vmem>>, %arg7: memref<1x32xf32, #tpu.memory_space<vmem>>, %arg8: memref<16x96xf32, #tpu.memory_space<vmem>>, %arg9: memref<16x96xf32, #tpu.memory_space<vmem>>) attributes {dimension_semantics = [#tpu.dimension_semantics<parallel>, #tpu.dimension_semantics<parallel>, #tpu.dimension_semantics<arbitrary>], iteration_bounds = array<i64: 1, 1, 1>, scalar_prefetch = 0 : i64, scratch_operands = 1 : i64, tpu.core_type = #tpu.core_type<tc>, window_params = [{transform_indices = @transform_0, window_bounds = array<i64: 16, 32>}, {transform_indices = @transform_1, window_bounds = array<i64: 32, 96>}, {transform_indices = @transform_2, window_bounds = array<i64: 1, 96>}, {pipeline_mode = #tpu.pipeline_mode<synchronous>, transform_indices = @transform_3, window_bounds = array<i64: 1, 32>}, {pipeline_mode = #tpu.pipeline_mode<synchronous>, transform_indices = @transform_4, window_bounds = array<i64: 1, 32>}, {transform_indices = @transform_5, window_bounds = array<i64: 16, 96>}]} {
    %c0_i32 = arith.constant 0 : i32
    %0 = arith.cmpi eq, %arg2, %c0_i32 : i32
    %1 = arith.extui %0 : i1 to i32
    %c0_i32_0 = arith.constant 0 : i32
    %2 = arith.cmpi ne, %1, %c0_i32_0 : i32
    scf.if %2 {
      %cst_19 = arith.constant 0.000000e+00 : f32
      %34 = vector.broadcast %cst_19 : f32 to vector<16x96xf32>
      %c0_20 = arith.constant 0 : index
      %c0_21 = arith.constant 0 : index
      %35 = vector.load %arg9[%c0_20, %c0_21] : memref<16x96xf32, #tpu.memory_space<vmem>>, vector<16x96xf32>
      tpu.vector_store %arg9[%c0_20, %c0_21], %34 {strides = array<i32>} : memref<16x96xf32, #tpu.memory_space<vmem>>, vector<16x96xf32>,
    } else {
    }
    %c0 = arith.constant 0 : index
    %c0_1 = arith.constant 0 : index
    %3 = vector.load %arg3[%c0, %c0_1] : memref<16x32xf32, #tpu.memory_space<vmem>>, vector<16x32xf32>
    %cst = arith.constant dense<0.000000e+00> : vector<16xf32>
    %4 = vector.multi_reduction <add>, %3, %cst [1] : vector<16x32xf32> to vector<16xf32>
    %5 = vector.shape_cast %4 : vector<16xf32> to vector<16x1xf32>
    %cst_2 = arith.constant 3.200000e+01 : f32
    %6 = vector.broadcast %cst_2 : f32 to vector<16x1xf32>
    %7 = arith.divf %5, %6 : vector<16x1xf32>
    %8 = vector.broadcast %7 : vector<16x1xf32> to vector<16x32xf32>
    %9 = arith.subf %3, %8 : vector<16x32xf32>
    %10 = arith.mulf %9, %9 : vector<16x32xf32>
    %cst_3 = arith.constant dense<0.000000e+00> : vector<16xf32>
    %11 = vector.multi_reduction <add>, %10, %cst_3 [1] : vector<16x32xf32> to vector<16xf32>
    %12 = vector.shape_cast %11 : vector<16xf32> to vector<16x1xf32>
    %cst_4 = arith.constant 3.200000e+01 : f32
    %13 = vector.broadcast %cst_4 : f32 to vector<16x1xf32>
    %14 = arith.divf %12, %13 : vector<16x1xf32>
    %cst_5 = arith.constant 9.99999974E-6 : f32
    %15 = vector.broadcast %cst_5 : f32 to vector<16x1xf32>
    %16 = arith.addf %14, %15 : vector<16x1xf32>
    %17 = math.rsqrt %16 : vector<16x1xf32>
    %18 = vector.broadcast %17 : vector<16x1xf32> to vector<16x32xf32>
    %19 = arith.mulf %9, %18 : vector<16x32xf32>
    %c0_6 = arith.constant 0 : index
    %c0_7 = arith.constant 0 : index
    %20 = vector.load %arg6[%c0_6, %c0_7] : memref<1x32xf32, #tpu.memory_space<vmem>>, vector<1x32xf32>
    %21 = vector.broadcast %20 : vector<1x32xf32> to vector<16x32xf32>
    %22 = arith.mulf %19, %21 : vector<16x32xf32>
    %c0_8 = arith.constant 0 : index
    %c0_9 = arith.constant 0 : index
    %23 = vector.load %arg7[%c0_8, %c0_9] : memref<1x32xf32, #tpu.memory_space<vmem>>, vector<1x32xf32>
    %24 = vector.broadcast %23 : vector<1x32xf32> to vector<16x32xf32>
    %25 = arith.addf %22, %24 : vector<16x32xf32>
    %c0_10 = arith.constant 0 : index
    %c0_11 = arith.constant 0 : index
    %26 = vector.load %arg9[%c0_10, %c0_11] : memref<16x96xf32, #tpu.memory_space<vmem>>, vector<16x96xf32>
    %c0_12 = arith.constant 0 : index
    %c0_13 = arith.constant 0 : index
    %27 = vector.load %arg4[%c0_12, %c0_13] : memref<32x96xf32, #tpu.memory_space<vmem>>, vector<32x96xf32>
    %cst_14 = arith.constant dense<0.000000e+00> : vector<16x96xf32>
    %28 = tpu.matmul %25, %27, %cst_14 {dimension_numbers = #tpu.dot_dimension_numbers<[1], [0], [0], [1], [0, 0, 1, 1], [], []>, precision = #tpu.contract_precision<fp32>} : vector<16x32xf32>, vector<32x96xf32>, vector<16x96xf32> -> vector<16x96xf32>
    %29 = arith.addf %26, %28 : vector<16x96xf32>
    %c0_15 = arith.constant 0 : index
    %c0_16 = arith.constant 0 : index
    %30 = vector.load %arg9[%c0_15, %c0_16] : memref<16x96xf32, #tpu.memory_space<vmem>>, vector<16x96xf32>
    tpu.vector_store %arg9[%c0_15, %c0_16], %29 {strides = array<i32>} : memref<16x96xf32, #tpu.memory_space<vmem>>, vector<16x96xf32>,
    %c0_i32_17 = arith.constant 0 : i32
    %31 = arith.cmpi eq, %arg2, %c0_i32_17 : i32
    %32 = arith.extui %31 : i1 to i32
    %c0_i32_18 = arith.constant 0 : i32
    %33 = arith.cmpi ne, %32, %c0_i32_18 : i32
    scf.if %33 {
      %c0_19 = arith.constant 0 : index
      %c0_20 = arith.constant 0 : index
      %34 = vector.load %arg9[%c0_19, %c0_20] : memref<16x96xf32, #tpu.memory_space<vmem>>, vector<16x96xf32>
      %c0_21 = arith.constant 0 : index
      %c0_22 = arith.constant 0 : index
      %35 = vector.load %arg5[%c0_21, %c0_22] : memref<1x96xf32, #tpu.memory_space<vmem>>, vector<1x96xf32>
      %36 = vector.broadcast %35 : vector<1x96xf32> to vector<16x96xf32>
      %37 = arith.addf %34, %36 : vector<16x96xf32>
      %c0_23 = arith.constant 0 : index
      %c0_24 = arith.constant 0 : index
      %38 = vector.load %arg8[%c0_23, %c0_24] : memref<16x96xf32, #tpu.memory_space<vmem>>, vector<16x96xf32>
      tpu.vector_store %arg8[%c0_23, %c0_24], %37 {strides = array<i32>} : memref<16x96xf32, #tpu.memory_space<vmem>>, vector<16x96xf32>,
    } else {
    }
    return
  }
  func.func @transform_0(%arg0: i32, %arg1: i32, %arg2: i32) -> (i32, i32) {
    %c0_i32 = arith.constant 0 : i32
    return %arg0, %arg2 : i32, i32
  }
  func.func @transform_1(%arg0: i32, %arg1: i32, %arg2: i32) -> (i32, i32) {
    %c0_i32 = arith.constant 0 : i32
    return %arg2, %arg1 : i32, i32
  }
  func.func @transform_2(%arg0: i32, %arg1: i32, %arg2: i32) -> (i32, i32) {
    %c0_i32 = arith.constant 0 : i32
    %c0_i32_0 = arith.constant 0 : i32
    return %c0_i32, %arg1 : i32, i32
  }
  func.func @transform_3(%arg0: i32, %arg1: i32, %arg2: i32) -> (i32, i32) {
    %c0_i32 = arith.constant 0 : i32
    %c0_i32_0 = arith.constant 0 : i32
    %c0_i32_1 = arith.constant 0 : i32
    return %c0_i32, %c0_i32_0 : i32, i32
  }
  func.func @transform_4(%arg0: i32, %arg1: i32, %arg2: i32) -> (i32, i32) {
    %c0_i32 = arith.constant 0 : i32
    %c0_i32_0 = arith.constant 0 : i32
    %c0_i32_1 = arith.constant 0 : i32
    return %c0_i32, %c0_i32_0 : i32, i32
  }
  func.func @transform_5(%arg0: i32, %arg1: i32, %arg2: i32) -> (i32, i32) {
    %c0_i32 = arith.constant 0 : i32
    return %arg0, %arg1 : i32, i32
  }
}

</mosaic_0001>

<llo_original>
// kernel: tpu_custom_call.1
$region0: #{tpu_custom_call.1}
  #allocation0 [shape = 'u32[]', space=smem, size = 0x4, offset = 0x4, fixed_abs, tag = 'smem constant byte address 0x4 - core index']
  #allocation1 [shape = 'u32[72,128]{1,0:T(1,128)}', space=vmem, size = 0x9000, scoped, tag = 'internal scratch']
  #allocation2 [shape = 'f32[16,96]{1,0:T(8,128)}', space=vmem, size = 0x2000, scoped, tag = 'scratch operand']
  %s0 = inlined_call_operand.hbm [shape: f32[16,32], index: 0, kind: input, shape index: {}]
  %s1 = inlined_call_operand.hbm [shape: f32[32,96], index: 1, kind: input, shape index: {}]
  %s2 = inlined_call_operand.vmem [shape: f32[1,96], index: 2, kind: input, shape index: {}]
  %s3 = inlined_call_operand.vmem [shape: f32[1,32], index: 3, kind: input, shape index: {}]
  %s4 = inlined_call_operand.vmem [shape: f32[1,32], index: 4, kind: input, shape index: {}]
  %s5 = inlined_call_operand.hbm [shape: f32[16,96], index: 5, kind: output, shape index: {}]
  %s6 = sld [smem:[#allocation0]]
  $region46: #{tpu_custom_call.1} parent=0
    _
  %s8 = ssub.s32 1, %s6
  %s9 = scalar_select 0, %s8, %s6
  $region1: #{tpu_custom_call.1} parent=0
    #allocation3 [shape = 'u8[8192]{0}', space=vmem, size = 0x2000, scoped, tag = 'input window, operand 0, single buffered']
    #allocation4 [shape = 's32[1]{0}', space=sflag, size = 0x4, scoped, tag = 'scoped memory for tpu_custom_call.1']
    #allocation5 [shape = 's32[1]{0}', space=sflag, size = 0x4, scoped, tag = 'scoped memory for tpu_custom_call.1']
    #allocation6 [shape = 'u8[16384]{0}', space=vmem, size = 0x4000, scoped, tag = 'input window, operand 1, single buffered']
    #allocation7 [shape = 's32[1]{0}', space=sflag, size = 0x4, scoped, tag = 'scoped memory for tpu_custom_call.1']
    #allocation8 [shape = 'u8[8192]{0}', space=vmem, size = 0x2000, scoped, tag = 'output window, operand 0, single buffered']
    %10 = vsyncpa [#allocation4], 0
    %11 = vsyncpa [#allocation7], 0
    %12 = vsyncpa [#allocation5], 0
    // Predicated region
    $region2: #{tpu_custom_call.1} parent=1 // pred_check
      _
    $region3: #{tpu_custom_call.1} parent=1 // pred_check_branch
      %14 = sbr.rel (0) target = $region5
    $region4: #{tpu_custom_call.1} parent=1 // pred_region
      %16 = vsyncadd [#allocation4], 0
      %s17 = sshll.u32 %s0, 4
      %s18 = int_to_ptr.hbm [resolvable:$true] %s17
      %s19 = sshll.u32 [#allocation3], 4
      %s20 = int_to_ptr.vmem [resolvable:$true] %s19
      %25 = dma.hbm_to_vmem [thread:$0]  %s18, 256, %s20, [#allocation4], 128, 128, 8
    $region5: #{tpu_custom_call.1} parent=1 // pred_fallthru
      _
    // Predicated region
    $region6: #{tpu_custom_call.1} parent=1 // pred_check
      _
    $region7: #{tpu_custom_call.1} parent=1 // pred_check_branch
      %27 = sbr.rel (0) target = $region9
    $region8: #{tpu_custom_call.1} parent=1 // pred_region
      %29 = vsyncadd [#allocation7], 0
      %s30 = sshll.u32 %s1, 4
      %s31 = int_to_ptr.hbm [resolvable:$true] %s30
      %s32 = sshll.u32 [#allocation6], 4
      %s33 = int_to_ptr.vmem [resolvable:$true] %s32
      %38 = dma.hbm_to_vmem [thread:$0]  %s31, 512, %s33, [#allocation7], 128, 128, 8
    $region9: #{tpu_custom_call.1} parent=1 // pred_fallthru
      _
    // Predicated region
    $region10: #{tpu_custom_call.1} parent=1 // pred_check
      _
    $region11: #{tpu_custom_call.1} parent=1 // pred_check_branch
      %40 = sbr.rel (0) target = $region13
    $region12: #{tpu_custom_call.1} parent=1 // pred_region
      _
    $region13: #{tpu_custom_call.1} parent=1 // pred_fallthru
      _
    // Predicated region
    $region14: #{tpu_custom_call.1} parent=1 // pred_check
      _
    $region15: #{tpu_custom_call.1} parent=1 // pred_check_branch
      %42 = sbr.rel (0) target = $region17
    $region16: #{tpu_custom_call.1} parent=1 // pred_region
      _
    $region17: #{tpu_custom_call.1} parent=1 // pred_fallthru
      _
    // Predicated region
    $region18: #{tpu_custom_call.1} parent=1 // pred_check
      _
    $region19: #{tpu_custom_call.1} parent=1 // pred_check_branch
      %44 = sbr.rel (0) target = $region21
    $region20: #{tpu_custom_call.1} parent=1 // pred_region
      _
    $region21: #{tpu_custom_call.1} parent=1 // pred_fallthru
      _
    // Predicated region
    $region22: #{tpu_custom_call.1} parent=1 // pred_check
      _
    $region23: #{tpu_custom_call.1} parent=1 // pred_check_branch
      %46 = sbr.rel (0) target = $region25
    $region24: #{tpu_custom_call.1} parent=1 // pred_region
      %48 = dma.done [#allocation4], 256
    $region25: #{tpu_custom_call.1} parent=1 // pred_fallthru
      _
    // Predicated region
    $region26: #{tpu_custom_call.1} parent=1 // pred_check
      _
    $region27: #{tpu_custom_call.1} parent=1 // pred_check_branch
      %50 = sbr.rel (0) target = $region29
    $region28: #{tpu_custom_call.1} parent=1 // pred_region
      %52 = dma.done [#allocation7], 512
    $region29: #{tpu_custom_call.1} parent=1 // pred_fallthru
      _
    %p53 = scmp.eq.s32.totalorder 0, 0
    // Predicated region
    $region30: #{tpu_custom_call.1} parent=1 // pred_check
      %p54 = pneg %p53
    $region31: #{tpu_custom_call.1} parent=1 // pred_check_branch
      %56 = sbr.rel (%p54) target = $region33
    $region32: #{tpu_custom_call.1} parent=1 // pred_region
      %vm57 = vcmask 785408
      %58 = vst.msk [vmem:[#allocation2] sm:$0xff] %vm57, 0.0
      %59 = vst.msk [vmem:[#allocation2 + $0x8] sm:$0xff] %vm57, 0.0
    $region33: #{tpu_custom_call.1} parent=1 // pred_fallthru
      _
    %v60 = vld [vmem:[#allocation3] sm:$0xff]
    %v61 = vld [vmem:[#allocation3 + $0x8] sm:$0xff]
    %vm62 = vcmask 261120
    %v63 = vsel %vm62, %v60, 0.0
    %64 = vadd.xlane.f32.xlu0 %v63
    %v65 = vpop.xlane.xlu0 %64
    %v66 = vsel %vm62, %v61, 0.0
    %67 = vadd.xlane.f32.xlu0 %v66
    %v68 = vpop.xlane.xlu0 %67
    %v69 = vrcp.pop 32.0
    %v70 = vmul.f32 32.0, %v69
    %v71 = vsub.f32 1.0, %v70
    %v72 = vmul.f32 %v69, %v71
    %v73 = vadd.f32 %v69, %v72
    %vm74 = vweird.f32 %v69
    %v75 = vsel %vm74, %v69, %v73
    %v76 = vmul.f32 %v65, %v75
    %v77 = vmul.f32 %v68, %v75
    %v78 = vsub.f32 %v60, %v76
    %v79 = vsub.f32 %v61, %v77
    %v80 = vmul.f32 %v78, %v78
    %v81 = vmul.f32 %v79, %v79
    %v82 = vsel %vm62, %v80, 0.0
    %83 = vadd.xlane.f32.xlu0 %v82
    %v84 = vpop.xlane.xlu0 %83
    %v85 = vsel %vm62, %v81, 0.0
    %86 = vadd.xlane.f32.xlu0 %v85
    %v87 = vpop.xlane.xlu0 %86
    %v88 = vmul.f32 %v84, %v75
    %v89 = vmul.f32 %v87, %v75
    %v90 = vadd.f32 %v88, 1e-05
    %v91 = vadd.f32 %v89, 1e-05
    %v92 = vrsqrt.pop %v90
    %v93 = vmul.f32 %v92, %v90
    %v94 = vmul.f32 %v93, %v92
    %v95 = vmul.f32 0.5, %v94
    %v96 = vsub.f32 1.5, %v95
    %v97 = vmul.f32 %v92, %v96
    %vm98 = vweird.f32 %v90
    %vm99 = vweird.f32 %v92
    %vm100 = vmor %vm98, %vm99
    %v101 = vsel %vm100, %v92, %v97
    %v102 = vrsqrt.pop %v91
    %v103 = vmul.f32 %v102, %v91
    %v104 = vmul.f32 %v103, %v102
    %v105 = vmul.f32 0.5, %v104
    %v106 = vsub.f32 1.5, %v105
    %v107 = vmul.f32 %v102, %v106
    %vm108 = vweird.f32 %v91
    %vm109 = vweird.f32 %v102
    %vm110 = vmor %vm108, %vm109
    %v111 = vsel %vm110, %v102, %v107
    %v112 = vmul.f32 %v78, %v101
    %v113 = vmul.f32 %v79, %v111
    %v114 = vld [vmem:[%s3] sm:$0x1]
    %v116 = vperm.slane %v114, 0
    %v118 = vmul.f32 %v112, %v116
    %v119 = vmul.f32 %v113, %v116
    %v120 = vld [vmem:[%s4] sm:$0x1]
    %v122 = vperm.slane %v120, 0
    %v124 = vadd.f32 %v118, %v122
    %v125 = vadd.f32 %v119, %v122
    %v126 = vld [vmem:[#allocation2] sm:$0xff]
    %v127 = vld [vmem:[#allocation2 + $0x8] sm:$0xff]
    %v128 = vld [vmem:[#allocation6] sm:$0xff]
    %v129 = vld [vmem:[#allocation6 + $0x8] sm:$0xff]
    %v130 = vld [vmem:[#allocation6 + $0x10] sm:$0xff]
    %v131 = vld [vmem:[#allocation6 + $0x18] sm:$0xff]
    %v133 = vsel %vm62, %v124, 0
    %v136 = vsel %vm62, %v125, 0
    %138 = vmatpush.msra.mxu0 0.0
    %139 = vmatpush.msra.mxu0 0.0
    %140 = vmatpush.msra.mxu0 0.0
    %141 = vmatpush.msra.mxu0 0.0
    %142 = vmatpush.msra.mxu0 0.0
    %143 = vmatpush.msra.mxu0 0.0
    %144 = vmatpush.msra.mxu0 0.0
    %145 = vmatpush.msra.mxu0 0.0
    %146 = vmatpush.msra.mxu0 0.0
    %147 = vmatpush.msra.mxu0 0.0
    %148 = vmatpush.msra.mxu0 0.0
    %149 = vmatpush.msra.mxu0 0.0
    %v150 = vand.u32 %v131, 4294901760
    %151 = vmatpush.msra.mxu0 %v150
    %v152 = vand.u32 %v130, 4294901760
    %153 = vmatpush.msra.mxu0 %v152
    %v154 = vand.u32 %v129, 4294901760
    %155 = vmatpush.msra.mxu0 %v154
    %v156 = vand.u32 %v128, 4294901760
    %157 = vmatpush.msra.mxu0 %v156
    %v158 = vand.u32 %v133, 4294901760
    %v159 = vsub.f32 %v133, %v158
    %v160 = vand.u32 %v159, 4294901760
    %v161 = vsub.f32 %v159, %v160
    %v162 = vand.u32 %v161, 4294901760
    %163 = vmatmul.f32.gmra.mxu0 %v162
    %v164 = vpop.f32.mrf.mxu0
    %v165 = vadd.f32 0.0, %v164
    %v166 = vand.u32 %v136, 4294901760
    %v167 = vsub.f32 %v136, %v166
    %v168 = vand.u32 %v167, 4294901760
    %v169 = vsub.f32 %v167, %v168
    %v170 = vand.u32 %v169, 4294901760
    %171 = vmatmul.f32.gmra.mxu0 %v170
    %v172 = vpop.f32.mrf.mxu0
    %v173 = vadd.f32 0.0, %v172
    %174 = vdwg.mxu0
    %175 = vmatpush.msra.mxu0 0.0
    %176 = vmatpush.msra.mxu0 0.0
    %177 = vmatpush.msra.mxu0 0.0
    %178 = vmatpush.msra.mxu0 0.0
    %179 = vmatpush.msra.mxu0 0.0
    %180 = vmatpush.msra.mxu0 0.0
    %181 = vmatpush.msra.mxu0 0.0
    %182 = vmatpush.msra.mxu0 0.0
    %183 = vmatpush.msra.mxu0 0.0
    %184 = vmatpush.msra.mxu0 0.0
    %185 = vmatpush.msra.mxu0 0.0
    %186 = vmatpush.msra.mxu0 0.0
    %v187 = vand.u32 %v131, 4294901760
    %v188 = vsub.f32 %v131, %v187
    %v189 = vand.u32 %v188, 4294901760
    %v190 = vsub.f32 %v188, %v189
    %v191 = vand.u32 %v190, 4294901760
    %192 = vmatpush.msra.mxu0 %v191
    %v193 = vand.u32 %v130, 4294901760
    %v194 = vsub.f32 %v130, %v193
    %v195 = vand.u32 %v194, 4294901760
    %v196 = vsub.f32 %v194, %v195
    %v197 = vand.u32 %v196, 4294901760
    %198 = vmatpush.msra.mxu0 %v197
    %v199 = vand.u32 %v129, 4294901760
    %v200 = vsub.f32 %v129, %v199
    %v201 = vand.u32 %v200, 4294901760
    %v202 = vsub.f32 %v200, %v201
    %v203 = vand.u32 %v202, 4294901760
    %204 = vmatpush.msra.mxu0 %v203
    %v205 = vand.u32 %v128, 4294901760
    %v206 = vsub.f32 %v128, %v205
    %v207 = vand.u32 %v206, 4294901760
    %v208 = vsub.f32 %v206, %v207
    %v209 = vand.u32 %v208, 4294901760
    %210 = vmatpush.msra.mxu0 %v209
    %v211 = vand.u32 %v133, 4294901760
    %212 = vmatmul.f32.gmra.mxu0 %v211
    %v213 = vpop.f32.mrf.mxu0
    %v214 = vadd.f32 %v165, %v213
    %v215 = vand.u32 %v136, 4294901760
    %216 = vmatmul.f32.gmra.mxu0 %v215
    %v217 = vpop.f32.mrf.mxu0
    %v218 = vadd.f32 %v173, %v217
    %219 = vdwg.mxu0
    %220 = vmatpush.msra.mxu0 0.0
    %221 = vmatpush.msra.mxu0 0.0
    %222 = vmatpush.msra.mxu0 0.0
    %223 = vmatpush.msra.mxu0 0.0
    %224 = vmatpush.msra.mxu0 0.0
    %225 = vmatpush.msra.mxu0 0.0
    %226 = vmatpush.msra.mxu0 0.0
    %227 = vmatpush.msra.mxu0 0.0
    %228 = vmatpush.msra.mxu0 0.0
    %229 = vmatpush.msra.mxu0 0.0
    %230 = vmatpush.msra.mxu0 0.0
    %231 = vmatpush.msra.mxu0 0.0
    %v232 = vand.u32 %v131, 4294901760
    %v233 = vsub.f32 %v131, %v232
    %234 = vmatpush.msra.mxu0 %v233
    %v235 = vand.u32 %v130, 4294901760
    %v236 = vsub.f32 %v130, %v235
    %237 = vmatpush.msra.mxu0 %v236
    %v238 = vand.u32 %v129, 4294901760
    %v239 = vsub.f32 %v129, %v238
    %240 = vmatpush.msra.mxu0 %v239
    %v241 = vand.u32 %v128, 4294901760
    %v242 = vsub.f32 %v128, %v241
    %243 = vmatpush.msra.mxu0 %v242
    %v244 = vand.u32 %v133, 4294901760
    %v245 = vsub.f32 %v133, %v244
    %246 = vmatmul.f32.gmra.mxu0 %v245
    %v247 = vpop.f32.mrf.mxu0
    %v248 = vadd.f32 %v214, %v247
    %v249 = vand.u32 %v136, 4294901760
    %v250 = vsub.f32 %v136, %v249
    %251 = vmatmul.f32.gmra.mxu0 %v250
    %v252 = vpop.f32.mrf.mxu0
    %v253 = vadd.f32 %v218, %v252
    %254 = vdwg.mxu0
    %255 = vmatpush.msra.mxu0 0.0
    %256 = vmatpush.msra.mxu0 0.0
    %257 = vmatpush.msra.mxu0 0.0
    %258 = vmatpush.msra.mxu0 0.0
    %259 = vmatpush.msra.mxu0 0.0
    %260 = vmatpush.msra.mxu0 0.0
    %261 = vmatpush.msra.mxu0 0.0
    %262 = vmatpush.msra.mxu0 0.0
    %263 = vmatpush.msra.mxu0 0.0
    %264 = vmatpush.msra.mxu0 0.0
    %265 = vmatpush.msra.mxu0 0.0
    %266 = vmatpush.msra.mxu0 0.0
    %v267 = vand.u32 %v131, 4294901760
    %268 = vmatpush.msra.mxu0 %v267
    %v269 = vand.u32 %v130, 4294901760
    %270 = vmatpush.msra.mxu0 %v269
    %v271 = vand.u32 %v129, 4294901760
    %272 = vmatpush.msra.mxu0 %v271
    %v273 = vand.u32 %v128, 4294901760
    %274 = vmatpush.msra.mxu0 %v273
    %v275 = vand.u32 %v133, 4294901760
    %v276 = vsub.f32 %v133, %v275
    %v277 = vand.u32 %v276, 4294901760
    %278 = vmatmul.f32.gmra.mxu0 %v277
    %v279 = vpop.f32.mrf.mxu0
    %v280 = vadd.f32 %v248, %v279
    %v281 = vand.u32 %v136, 4294901760
    %v282 = vsub.f32 %v136, %v281
    %v283 = vand.u32 %v282, 4294901760
    %284 = vmatmul.f32.gmra.mxu0 %v283
    %v285 = vpop.f32.mrf.mxu0
    %v286 = vadd.f32 %v253, %v285
    %287 = vdwg.mxu0
    %288 = vmatpush.msra.mxu0 0.0
    %289 = vmatpush.msra.mxu0 0.0
    %290 = vmatpush.msra.mxu0 0.0
    %291 = vmatpush.msra.mxu0 0.0
    %292 = vmatpush.msra.mxu0 0.0
    %293 = vmatpush.msra.mxu0 0.0
    %294 = vmatpush.msra.mxu0 0.0
    %295 = vmatpush.msra.mxu0 0.0
    %296 = vmatpush.msra.mxu0 0.0
    %297 = vmatpush.msra.mxu0 0.0
    %298 = vmatpush.msra.mxu0 0.0
    %299 = vmatpush.msra.mxu0 0.0
    %v300 = vand.u32 %v131, 4294901760
    %v301 = vsub.f32 %v131, %v300
    %v302 = vand.u32 %v301, 4294901760
    %303 = vmatpush.msra.mxu0 %v302
    %v304 = vand.u32 %v130, 4294901760
    %v305 = vsub.f32 %v130, %v304
    %v306 = vand.u32 %v305, 4294901760
    %307 = vmatpush.msra.mxu0 %v306
    %v308 = vand.u32 %v129, 4294901760
    %v309 = vsub.f32 %v129, %v308
    %v310 = vand.u32 %v309, 4294901760
    %311 = vmatpush.msra.mxu0 %v310
    %v312 = vand.u32 %v128, 4294901760
    %v313 = vsub.f32 %v128, %v312
    %v314 = vand.u32 %v313, 4294901760
    %315 = vmatpush.msra.mxu0 %v314
    %v316 = vand.u32 %v133, 4294901760
    %317 = vmatmul.f32.gmra.mxu0 %v316
    %v318 = vpop.f32.mrf.mxu0
    %v319 = vadd.f32 %v280, %v318
    %v320 = vand.u32 %v136, 4294901760
    %321 = vmatmul.f32.gmra.mxu0 %v320
    %v322 = vpop.f32.mrf.mxu0
    %v323 = vadd.f32 %v286, %v322
    %324 = vdwg.mxu0
    %325 = vmatpush.msra.mxu0 0.0
    %326 = vmatpush.msra.mxu0 0.0
    %327 = vmatpush.msra.mxu0 0.0
    %328 = vmatpush.msra.mxu0 0.0
    %329 = vmatpush.msra.mxu0 0.0
    %330 = vmatpush.msra.mxu0 0.0
    %331 = vmatpush.msra.mxu0 0.0
    %332 = vmatpush.msra.mxu0 0.0
    %333 = vmatpush.msra.mxu0 0.0
    %334 = vmatpush.msra.mxu0 0.0
    %335 = vmatpush.msra.mxu0 0.0
    %336 = vmatpush.msra.mxu0 0.0
    %v337 = vand.u32 %v131, 4294901760
    %338 = vmatpush.msra.mxu0 %v337
    %v339 = vand.u32 %v130, 4294901760
    %340 = vmatpush.msra.mxu0 %v339
    %v341 = vand.u32 %v129, 4294901760
    %342 = vmatpush.msra.mxu0 %v341
    %v343 = vand.u32 %v128, 4294901760
    %344 = vmatpush.msra.mxu0 %v343
    %v345 = vand.u32 %v133, 4294901760
    %346 = vmatmul.f32.gmra.mxu0 %v345
    %v347 = vpop.f32.mrf.mxu0
    %v348 = vadd.f32 %v319, %v347
    %v349 = vand.u32 %v136, 4294901760
    %350 = vmatmul.f32.gmra.mxu0 %v349
    %v351 = vpop.f32.mrf.mxu0
    %v352 = vadd.f32 %v323, %v351
    %353 = vdwg.mxu0
    %v354 = vadd.f32 %v126, %v348
    %v355 = vadd.f32 %v127, %v352
    %vm356 = vcmask 785408
    %357 = vst.msk [vmem:[#allocation2] sm:$0xff] %vm356, %v354
    %358 = vst.msk [vmem:[#allocation2 + $0x8] sm:$0xff] %vm356, %v355
    // Predicated region
    $region34: #{tpu_custom_call.1} parent=1 // pred_check
      %p359 = pneg %p53
    $region35: #{tpu_custom_call.1} parent=1 // pred_check_branch
      %361 = sbr.rel (%p359) target = $region37
    $region36: #{tpu_custom_call.1} parent=1 // pred_region
      %v362 = vld [vmem:[#allocation2] sm:$0xff]
      %v363 = vld [vmem:[#allocation2 + $0x8] sm:$0xff]
      %v364 = vld [vmem:[%s2] sm:$0x1]
      %v366 = vperm.slane %v364, 0
      %v368 = vadd.f32 %v362, %v366
      %v369 = vadd.f32 %v363, %v366
      %370 = vst.msk [vmem:[#allocation8] sm:$0xff] %vm356, %v368
      %371 = vst.msk [vmem:[#allocation8 + $0x8] sm:$0xff] %vm356, %v369
    $region37: #{tpu_custom_call.1} parent=1 // pred_fallthru
      _
    // Predicated region
    $region38: #{tpu_custom_call.1} parent=1 // pred_check
      _
    $region39: #{tpu_custom_call.1} parent=1 // pred_check_branch
      %373 = sbr.rel (0) target = $region41
    $region40: #{tpu_custom_call.1} parent=1 // pred_region
      %375 = vsyncadd [#allocation5], 0
      %s376 = sshll.u32 [#allocation8], 4
      %s377 = int_to_ptr.vmem [resolvable:$true] %s376
      %s378 = sshll.u32 %s5, 4
      %s379 = int_to_ptr.hbm [resolvable:$true] %s378
      %384 = dma.vmem_to_hbm [thread:$0]  %s377, 256, %s379, [#allocation5], 128, 128, 8
    $region41: #{tpu_custom_call.1} parent=1 // pred_fallthru
      _
    // Predicated region
    $region42: #{tpu_custom_call.1} parent=1 // pred_check
      _
    $region43: #{tpu_custom_call.1} parent=1 // pred_check_branch
      %386 = sbr.rel (0) target = $region45
    $region44: #{tpu_custom_call.1} parent=1 // pred_region
      %388 = dma.done [#allocation5], 256
    $region45: #{tpu_custom_call.1} parent=1 // pred_fallthru
      _
    %389 = vsyncpa [#allocation4], 1
    %390 = vsyncpa [#allocation7], 1
    %391 = vsyncpa [#allocation5], 1

</llo_original>
